<compile_context>
chip_gen: v7x
topology: tpu7x:2x2x1
jax: 0.10.0
libtpu: 0.0.40
codegen_flags: <defaults>
</compile_context>

<pallas_src>
import functools

import jax
import jax.numpy as jnp
from jax.experimental import pallas as pl
from jax.experimental.pallas import tpu as pltpu


# ----------------------------------------------------------------------------
# Activation selection (mirrors the PyTorch `acts` switch).
# ----------------------------------------------------------------------------
def _make_act(acts: str):
    if acts == "rectify":
        return lambda x: jnp.maximum(x, 0.0)
    elif acts == "selu":
        alpha = 1.6732632423543772848170429916717
        scale = 1.0507009873554804934193349852946
        return lambda x: scale * jnp.where(x > 0, x, alpha * (jnp.exp(x) - 1.0))
    elif acts == "elu":
        return lambda x: jnp.where(x > 0, x, jnp.exp(x) - 1.0)
    elif acts == "leaky":
        return lambda x: jnp.where(x > 0, x, 0.01 * x)
    elif acts == "softplus":
        return lambda x: jnp.logaddexp(x, 0.0)
    elif acts == "tanh":
        return jnp.tanh
    elif acts == "prelu":
        # nn.PReLU() default: single learnable slope initialized to 0.25.
        return lambda x: jnp.where(x > 0, x, 0.25 * x)
    else:
        raise ValueError(f"unknown activation: {acts}")


# ----------------------------------------------------------------------------
# Fused MLP kernel (transposed / lane-dense layout, BN pre-folded into W3/b3):
#   h1 = act(W1 @ x + b1);  h2 = act(W2 @ h1 + b2);  out = W3' @ h2 + b3'
# Shapes inside the kernel:  x (in, bt), h1 (h0, bt), h2 (h1, bt), out (o, bt)
# with bt (batch tile) on the 128-wide lane axis.
# ----------------------------------------------------------------------------
def _mlp_kernel(x_ref, w1_ref, b1_ref, w2_ref, b2_ref, w3_ref, b3_ref,
                o_ref, *, act_fn):
    x = x_ref[...]                                                  # (in, bt)

    h1 = jnp.dot(w1_ref[...], x, preferred_element_type=jnp.float32)
    h1 = act_fn(h1 + b1_ref[...])                                   # (h0, bt)

    h2 = jnp.dot(w2_ref[...], h1, preferred_element_type=jnp.float32)
    h2 = act_fn(h2 + b2_ref[...])                                   # (h1, bt)

    y = jnp.dot(w3_ref[...], h2, preferred_element_type=jnp.float32)
    o_ref[...] = (y + b3_ref[...]).astype(o_ref.dtype)              # (out, bt)


def neural_network_forward(x, params, *, acts="rectify", eps=1e-5,
                           batch_tile=256):
    """Fused NeuralNetwork forward pass as a single Pallas kernel.

    x      : (B, input_size) float32
    params : dict with PyTorch-orientation tensors:
               w1 (h0,in)  b1 (h0,)   w2 (h1,h0) b2 (h1,)
               w3 (o,h1)   b3 (o,)    gamma/beta/run_mean/run_var (o,)
    """
    B, in_size = x.shape
    h0 = params["w1"].shape[0]
    h1 = params["w2"].shape[0]
    out_size = params["w3"].shape[0]
    assert batch_tile % 128 == 0, "batch_tile must be a multiple of 128 (lane)"

    # --- host-side layout + BN fold ------------------------------------------
    # Transposed data layout: batch on the lane (last) axis.
    x_t = x.T                                                       # (in, B)
    Bp = ((B + batch_tile - 1) // batch_tile) * batch_tile
    if Bp != B:
        x_t = jnp.pad(x_t, ((0, 0), (0, Bp - B)))                   # pad batch

    b1 = params["b1"].reshape(h0, 1)
    b2 = params["b2"].reshape(h1, 1)

    # Fold BatchNorm1d (eval) into out_fc:  scale = gamma * rsqrt(var+eps)
    scale = params["gamma"] * jax.lax.rsqrt(params["run_var"] + eps)
    w3f = params["w3"] * scale[:, None]                             # (o, h1)
    b3f = ((params["b3"] - params["run_mean"]) * scale
           + params["beta"]).reshape(out_size, 1)                   # (o, 1)

    act_fn = _make_act(acts)
    kernel = functools.partial(_mlp_kernel, act_fn=act_fn)

    grid = (Bp // batch_tile,)

    def const_spec(shape):
        # Small parameters: full tensor block, same block every grid step.
        return pl.BlockSpec(shape, lambda i: (0, 0))

    out_t = pl.pallas_call(
        kernel,
        out_shape=jax.ShapeDtypeStruct((out_size, Bp), jnp.float32),
        grid_spec=pltpu.PrefetchScalarGridSpec(
            num_scalar_prefetch=0,
            grid=grid,
            in_specs=[
                pl.BlockSpec((in_size, batch_tile), lambda i: (0, i)),  # x^T
                const_spec((h0, in_size)),       # w1
                const_spec((h0, 1)),             # b1
                const_spec((h1, h0)),            # w2
                const_spec((h1, 1)),             # b2
                const_spec((out_size, h1)),      # w3 (BN-folded)
                const_spec((out_size, 1)),       # b3 (BN-folded)
            ],
            out_specs=pl.BlockSpec((out_size, batch_tile), lambda i: (0, i)),
        ),
        compiler_params=pltpu.CompilerParams(
            dimension_semantics=("parallel",)),   # shards across v7x TCs
    )(x_t, params["w1"], b1, params["w2"], b2, w3f, b3f)

    # Back to the module's (B, out_size) layout.
    return out_t[:, :B].T


# ----------------------------------------------------------------------------
# Deterministic parameter init (PyTorch nn.Linear default: U(-1/sqrt(fan_in),+))
# Stored in PyTorch orientation: W (out, in), b (out,).
# ----------------------------------------------------------------------------
def init_params(key, input_size, output_size, hidden):
    def linear(key, fan_in, fan_out):
        kw, kb = jax.random.split(key)
        bound = 1.0 / jnp.sqrt(fan_in)
        w = jax.random.uniform(kw, (fan_out, fan_in), jnp.float32, -bound, bound)
        b = jax.random.uniform(kb, (fan_out,), jnp.float32, -bound, bound)
        return w, b

    k1, k2, k3 = jax.random.split(key, 3)
    w1, b1 = linear(k1, input_size, hidden[0])
    w2, b2 = linear(k2, hidden[0], hidden[1])
    w3, b3 = linear(k3, hidden[1], output_size)
    return dict(
        w1=w1, b1=b1, w2=w2, b2=b2, w3=w3, b3=b3,
        gamma=jnp.ones((output_size,), jnp.float32),       # BN weight init
        beta=jnp.zeros((output_size,), jnp.float32),       # BN bias init
        run_mean=jnp.zeros((output_size,), jnp.float32),   # BN running_mean
        run_var=jnp.ones((output_size,), jnp.float32),     # BN running_var
    )


# ----------------------------------------------------------------------------
# Pure-JAX reference for correctness check (standard (B, feat) layout).
# ----------------------------------------------------------------------------
def reference_forward(x, p, *, acts="rectify", eps=1e-5):
    act = _make_act(acts)
    h = act(x @ p["w1"].T + p["b1"])
    h = act(h @ p["w2"].T + p["b2"])
    y = h @ p["w3"].T + p["b3"]
    return (y - p["run_mean"]) / jnp.sqrt(p["run_var"] + eps) * p["gamma"] + p["beta"]


if __name__ == "__main__":
    # Shapes consistent with NB: encoder maps input_size -> latent*categorical.
    input_size = 16
    latent_size, categorical_size = 4, 2
    output_size = latent_size * categorical_size          # 8
    hidden = (32, 32)
    acts = "rectify"

    # Lane-dense tiling: batch_tile multiple of 128; B = 2 * batch_tile gives
    # two "parallel" grid steps so both v7x TensorCores get work.
    batch = 512
    batch_tile = 256

    key = jax.random.PRNGKey(0)
    kx, kp = jax.random.split(key)
    x = jax.random.normal(kx, (batch, input_size), jnp.float32)
    params = init_params(kp, input_size, output_size, hidden)

    out = neural_network_forward(x, params, acts=acts, batch_tile=batch_tile)
    out = jax.block_until_ready(out)

    ref = reference_forward(x, params, acts=acts)
    assert out.shape == (batch, output_size)
    assert jnp.allclose(out, ref, atol=1e-4, rtol=1e-4), "mismatch vs reference"

    print("KERNEL_OK")
</pallas_src>

<mosaic_0001>
module attributes {stable_mosaic.version = 11 : i64} {
  func.func @_mlp_kernel(%arg0: i32, %arg1: memref<16x256xf32, #tpu.memory_space<vmem>>, %arg2: memref<32x16xf32, #tpu.memory_space<vmem>>, %arg3: memref<32x1xf32, #tpu.memory_space<vmem>>, %arg4: memref<32x32xf32, #tpu.memory_space<vmem>>, %arg5: memref<32x1xf32, #tpu.memory_space<vmem>>, %arg6: memref<8x32xf32, #tpu.memory_space<vmem>>, %arg7: memref<8x1xf32, #tpu.memory_space<vmem>>, %arg8: memref<8x256xf32, #tpu.memory_space<vmem>>) attributes {dimension_semantics = [#tpu.dimension_semantics<parallel>], iteration_bounds = array<i64: 2>, scalar_prefetch = 0 : i64, scratch_operands = 0 : i64, tpu.core_type = #tpu.core_type<tc>, window_params = [{transform_indices = @transform_0, window_bounds = array<i64: 16, 256>}, {pipeline_mode = #tpu.pipeline_mode<synchronous>, transform_indices = @transform_1, window_bounds = array<i64: 32, 16>}, {pipeline_mode = #tpu.pipeline_mode<synchronous>, transform_indices = @transform_2, window_bounds = array<i64: 32, 1>}, {pipeline_mode = #tpu.pipeline_mode<synchronous>, transform_indices = @transform_3, window_bounds = array<i64: 32, 32>}, {pipeline_mode = #tpu.pipeline_mode<synchronous>, transform_indices = @transform_4, window_bounds = array<i64: 32, 1>}, {pipeline_mode = #tpu.pipeline_mode<synchronous>, transform_indices = @transform_5, window_bounds = array<i64: 8, 32>}, {pipeline_mode = #tpu.pipeline_mode<synchronous>, transform_indices = @transform_6, window_bounds = array<i64: 8, 1>}, {transform_indices = @transform_7, window_bounds = array<i64: 8, 256>}]} {
    %c0 = arith.constant 0 : index
    %c0_0 = arith.constant 0 : index
    %0 = vector.load %arg1[%c0, %c0_0] : memref<16x256xf32, #tpu.memory_space<vmem>>, vector<16x256xf32>
    %c0_1 = arith.constant 0 : index
    %c0_2 = arith.constant 0 : index
    %1 = vector.load %arg2[%c0_1, %c0_2] : memref<32x16xf32, #tpu.memory_space<vmem>>, vector<32x16xf32>
    %cst = arith.constant dense<0.000000e+00> : vector<32x256xf32>
    %2 = tpu.matmul %1, %0, %cst {dimension_numbers = #tpu.dot_dimension_numbers<[1], [0], [0], [1], [0, 0, 1, 1], [], []>} : vector<32x16xf32>, vector<16x256xf32>, vector<32x256xf32> -> vector<32x256xf32>
    %c0_3 = arith.constant 0 : index
    %c0_4 = arith.constant 0 : index
    %3 = vector.load %arg3[%c0_3, %c0_4] : memref<32x1xf32, #tpu.memory_space<vmem>>, vector<32x1xf32>
    %4 = vector.broadcast %3 : vector<32x1xf32> to vector<32x256xf32>
    %5 = arith.addf %2, %4 : vector<32x256xf32>
    %cst_5 = arith.constant 0.000000e+00 : f32
    %6 = vector.broadcast %cst_5 : f32 to vector<32x256xf32>
    %7 = arith.maximumf %5, %6 : vector<32x256xf32>
    %c0_6 = arith.constant 0 : index
    %c0_7 = arith.constant 0 : index
    %8 = vector.load %arg4[%c0_6, %c0_7] : memref<32x32xf32, #tpu.memory_space<vmem>>, vector<32x32xf32>
    %cst_8 = arith.constant dense<0.000000e+00> : vector<32x256xf32>
    %9 = tpu.matmul %8, %7, %cst_8 {dimension_numbers = #tpu.dot_dimension_numbers<[1], [0], [0], [1], [0, 0, 1, 1], [], []>} : vector<32x32xf32>, vector<32x256xf32>, vector<32x256xf32> -> vector<32x256xf32>
    %c0_9 = arith.constant 0 : index
    %c0_10 = arith.constant 0 : index
    %10 = vector.load %arg5[%c0_9, %c0_10] : memref<32x1xf32, #tpu.memory_space<vmem>>, vector<32x1xf32>
    %11 = vector.broadcast %10 : vector<32x1xf32> to vector<32x256xf32>
    %12 = arith.addf %9, %11 : vector<32x256xf32>
    %cst_11 = arith.constant 0.000000e+00 : f32
    %13 = vector.broadcast %cst_11 : f32 to vector<32x256xf32>
    %14 = arith.maximumf %12, %13 : vector<32x256xf32>
    %c0_12 = arith.constant 0 : index
    %c0_13 = arith.constant 0 : index
    %15 = vector.load %arg6[%c0_12, %c0_13] : memref<8x32xf32, #tpu.memory_space<vmem>>, vector<8x32xf32>
    %cst_14 = arith.constant dense<0.000000e+00> : vector<8x256xf32>
    %16 = tpu.matmul %15, %14, %cst_14 {dimension_numbers = #tpu.dot_dimension_numbers<[1], [0], [0], [1], [0, 0, 1, 1], [], []>} : vector<8x32xf32>, vector<32x256xf32>, vector<8x256xf32> -> vector<8x256xf32>
    %c0_15 = arith.constant 0 : index
    %c0_16 = arith.constant 0 : index
    %17 = vector.load %arg7[%c0_15, %c0_16] : memref<8x1xf32, #tpu.memory_space<vmem>>, vector<8x1xf32>
    %18 = vector.broadcast %17 : vector<8x1xf32> to vector<8x256xf32>
    %19 = arith.addf %16, %18 : vector<8x256xf32>
    %c0_17 = arith.constant 0 : index
    %c0_18 = arith.constant 0 : index
    %20 = vector.load %arg8[%c0_17, %c0_18] : memref<8x256xf32, #tpu.memory_space<vmem>>, vector<8x256xf32>
    tpu.vector_store %arg8[%c0_17, %c0_18], %19 {strides = array<i32>} : memref<8x256xf32, #tpu.memory_space<vmem>>, vector<8x256xf32>,
    return
  }
  func.func @transform_0(%arg0: i32) -> (i32, i32) {
    %c0_i32 = arith.constant 0 : i32
    %c0_i32_0 = arith.constant 0 : i32
    return %c0_i32, %arg0 : i32, i32
  }
  func.func @transform_1(%arg0: i32) -> (i32, i32) {
    %c0_i32 = arith.constant 0 : i32
    %c0_i32_0 = arith.constant 0 : i32
    %c0_i32_1 = arith.constant 0 : i32
    return %c0_i32, %c0_i32_0 : i32, i32
  }
  func.func @transform_2(%arg0: i32) -> (i32, i32) {
    %c0_i32 = arith.constant 0 : i32
    %c0_i32_0 = arith.constant 0 : i32
    %c0_i32_1 = arith.constant 0 : i32
    return %c0_i32, %c0_i32_0 : i32, i32
  }
  func.func @transform_3(%arg0: i32) -> (i32, i32) {
    %c0_i32 = arith.constant 0 : i32
    %c0_i32_0 = arith.constant 0 : i32
    %c0_i32_1 = arith.constant 0 : i32
    return %c0_i32, %c0_i32_0 : i32, i32
  }
  func.func @transform_4(%arg0: i32) -> (i32, i32) {
    %c0_i32 = arith.constant 0 : i32
    %c0_i32_0 = arith.constant 0 : i32
    %c0_i32_1 = arith.constant 0 : i32
    return %c0_i32, %c0_i32_0 : i32, i32
  }
  func.func @transform_5(%arg0: i32) -> (i32, i32) {
    %c0_i32 = arith.constant 0 : i32
    %c0_i32_0 = arith.constant 0 : i32
    %c0_i32_1 = arith.constant 0 : i32
    return %c0_i32, %c0_i32_0 : i32, i32
  }
  func.func @transform_6(%arg0: i32) -> (i32, i32) {
    %c0_i32 = arith.constant 0 : i32
    %c0_i32_0 = arith.constant 0 : i32
    %c0_i32_1 = arith.constant 0 : i32
    return %c0_i32, %c0_i32_0 : i32, i32
  }
  func.func @transform_7(%arg0: i32) -> (i32, i32) {
    %c0_i32 = arith.constant 0 : i32
    %c0_i32_0 = arith.constant 0 : i32
    return %c0_i32, %arg0 : i32, i32
  }
}

</mosaic_0001>

<llo_original>
// kernel: tpu_custom_call.1
$region0: #{tpu_custom_call.1}
  #allocation0 [shape = 'u32[]', space=smem, size = 0x4, offset = 0x4, fixed_abs, tag = 'smem constant byte address 0x4 - core index']
  #allocation1 [shape = 'u32[144,128]{1,0:T(1,128)}', space=vmem, size = 0x12000, scoped, tag = 'internal scratch']
  %s0 = inlined_call_operand.vmem [shape: f32[16,512], index: 0, kind: input, shape index: {}]
  %s1 = inlined_call_operand.vmem [shape: f32[32,16], index: 1, kind: input, shape index: {}]
  %s2 = inlined_call_operand.vmem [shape: f32[32,1], index: 2, kind: input, shape index: {}]
  %s3 = inlined_call_operand.vmem [shape: f32[32,32], index: 3, kind: input, shape index: {}]
  %s4 = inlined_call_operand.vmem [shape: f32[32,1], index: 4, kind: input, shape index: {}]
  %s5 = inlined_call_operand.vmem [shape: f32[8,32], index: 5, kind: input, shape index: {}]
  %s6 = inlined_call_operand.vmem [shape: f32[8,1], index: 6, kind: input, shape index: {}]
  %s7 = inlined_call_operand.hbm [shape: f32[8,512], index: 7, kind: output, shape index: {}]
  %s8 = sld [smem:[#allocation0]]
  $region84: #{tpu_custom_call.1} parent=0
    _
  %s10 = ssub.s32 1, %s8
  %s11 = scalar_select 0, %s10, %s8
  $region1: #{tpu_custom_call.1} parent=0
    #allocation2 [shape = 'u8[32768]{0}', space=vmem, size = 0x8000, scoped, tag = 'input window, operand 0']
    #allocation3 [shape = 'u8[16384]{0}', space=vmem, size = 0x4000, scoped, tag = 'output window, operand 0']
    #allocation4 [shape = 's32[2]{0}', space=sflag, size = 0x8, scoped, tag = 'scoped memory for tpu_custom_call.1']
    %12 = vsyncpa [#allocation4], 0
    %s13 = scalar_lea.sflag [#allocation4], 1
    %14 = vsyncpa %s13, 0
    loop: start=0, step=1, limit=4
    $region2: #{tpu_custom_call.1} parent=1 // loop_pre_header
      _
    $region3: #{tpu_custom_call.1} parent=1 // loop_header
      %s16 = sphi 0, %s20
      %p17 = scmp.ge.s32.totalorder %s16, 4
      %s26 = sphi 0, %s28
      %s29 = sphi 0, %s26
      %s30 = sphi 0, %s29
      %s46 = sphi 0, %s30
      %s50 = sphi 0, %s50
      %s52 = sphi 0, %s50
      %s53 = sphi 0, %s52
      %s67 = sphi 0, %s53
      %s71 = sphi 0, %s71
      %s73 = sphi 0, %s71
      %s74 = sphi 0, %s73
      %s88 = sphi 0, %s74
      %s92 = sphi 0, %s92
      %s94 = sphi 0, %s92
      %s95 = sphi 0, %s94
      %s109 = sphi 0, %s95
      %s113 = sphi 0, %s113
      %s115 = sphi 0, %s113
      %s116 = sphi 0, %s115
      %s130 = sphi 0, %s116
      %s134 = sphi 0, %s134
      %s136 = sphi 0, %s134
      %s137 = sphi 0, %s136
      %s151 = sphi 0, %s137
      %s155 = sphi 0, %s155
      %s157 = sphi 0, %s155
      %s158 = sphi 0, %s157
      %s172 = sphi 0, %s158
      %s178 = sphi 0, %s180
      %s181 = sphi 0, %s178
      %s182 = sphi 0, %s181
      %s198 = sphi 0, %s182
    $region4: #{tpu_custom_call.1} parent=1 // loop_header_branch
      %19 = sbr.rel (%p17) target = $region8
    $region5: #{tpu_custom_call.1} parent=1 // loop_body
      %s21 = ssub.s32 %s16, 1
      %s22 = ssub.s32 %s16, 2
      %s23 = sadd.s32 %s16, 1
      %s24 = ssub.s32 %s16, %s23
      %p25 = scmp.eq.s32.totalorder %s24, 0
      %s27 = sadd.s32 %s26, 1
      %s28 = scalar_select %p25, %s26, %s27
      %p31 = pneg %p25
      %p32 = scmp.eq.s32.totalorder %s16, 1
      %p33 = por %p31, %p32
      %p34 = scmp.ne.s32.totalorder %s26, %s29
      %p35 = scmp.eq.s32.totalorder %s16, 0
      %p36 = por %p34, %p35
      %p37 = scmp.ne.s32.totalorder %s26, %s29
      %p38 = scmp.eq.s32.totalorder %s21, 1
      %p39 = por %p37, %p38
      %p40 = scmp.ne.s32.totalorder %s29, %s30
      %p41 = scmp.eq.s32.totalorder %s21, 0
      %p42 = por %p40, %p41
      %p43 = scmp.ne.s32.totalorder %s29, %s30
      %p44 = scmp.eq.s32.totalorder %s22, 1
      %p45 = por %p43, %p44
      %p47 = scmp.ne.s32.totalorder %s30, %s46
      %p48 = scmp.eq.s32.totalorder %s22, 0
      %p49 = por %p47, %p48
      %s51 = sadd.s32 %s50, 1
      %p54 = scmp.eq.s32.totalorder %s16, 1
      %p55 = scmp.ne.s32.totalorder %s50, %s52
      %p56 = scmp.eq.s32.totalorder %s16, 0
      %p57 = por %p55, %p56
      %p58 = scmp.ne.s32.totalorder %s50, %s52
      %p59 = scmp.eq.s32.totalorder %s21, 1
      %p60 = por %p58, %p59
      %p61 = scmp.ne.s32.totalorder %s52, %s53
      %p62 = scmp.eq.s32.totalorder %s21, 0
      %p63 = por %p61, %p62
      %p64 = scmp.ne.s32.totalorder %s52, %s53
      %p65 = scmp.eq.s32.totalorder %s22, 1
      %p66 = por %p64, %p65
      %p68 = scmp.ne.s32.totalorder %s53, %s67
      %p69 = scmp.eq.s32.totalorder %s22, 0
      %p70 = por %p68, %p69
      %s72 = sadd.s32 %s71, 1
      %p75 = scmp.eq.s32.totalorder %s16, 1
      %p76 = scmp.ne.s32.totalorder %s71, %s73
      %p77 = scmp.eq.s32.totalorder %s16, 0
      %p78 = por %p76, %p77
      %p79 = scmp.ne.s32.totalorder %s71, %s73
      %p80 = scmp.eq.s32.totalorder %s21, 1
      %p81 = por %p79, %p80
      %p82 = scmp.ne.s32.totalorder %s73, %s74
      %p83 = scmp.eq.s32.totalorder %s21, 0
      %p84 = por %p82, %p83
      %p85 = scmp.ne.s32.totalorder %s73, %s74
      %p86 = scmp.eq.s32.totalorder %s22, 1
      %p87 = por %p85, %p86
      %p89 = scmp.ne.s32.totalorder %s74, %s88
      %p90 = scmp.eq.s32.totalorder %s22, 0
      %p91 = por %p89, %p90
      %s93 = sadd.s32 %s92, 1
      %p96 = scmp.eq.s32.totalorder %s16, 1
      %p97 = scmp.ne.s32.totalorder %s92, %s94
      %p98 = scmp.eq.s32.totalorder %s16, 0
      %p99 = por %p97, %p98
      %p100 = scmp.ne.s32.totalorder %s92, %s94
      %p101 = scmp.eq.s32.totalorder %s21, 1
      %p102 = por %p100, %p101
      %p103 = scmp.ne.s32.totalorder %s94, %s95
      %p104 = scmp.eq.s32.totalorder %s21, 0
      %p105 = por %p103, %p104
      %p106 = scmp.ne.s32.totalorder %s94, %s95
      %p107 = scmp.eq.s32.totalorder %s22, 1
      %p108 = por %p106, %p107
      %p110 = scmp.ne.s32.totalorder %s95, %s109
      %p111 = scmp.eq.s32.totalorder %s22, 0
      %p112 = por %p110, %p111
      %s114 = sadd.s32 %s113, 1
      %p117 = scmp.eq.s32.totalorder %s16, 1
      %p118 = scmp.ne.s32.totalorder %s113, %s115
      %p119 = scmp.eq.s32.totalorder %s16, 0
      %p120 = por %p118, %p119
      %p121 = scmp.ne.s32.totalorder %s113, %s115
      %p122 = scmp.eq.s32.totalorder %s21, 1
      %p123 = por %p121, %p122
      %p124 = scmp.ne.s32.totalorder %s115, %s116
      %p125 = scmp.eq.s32.totalorder %s21, 0
      %p126 = por %p124, %p125
      %p127 = scmp.ne.s32.totalorder %s115, %s116
      %p128 = scmp.eq.s32.totalorder %s22, 1
      %p129 = por %p127, %p128
      %p131 = scmp.ne.s32.totalorder %s116, %s130
      %p132 = scmp.eq.s32.totalorder %s22, 0
      %p133 = por %p131, %p132
      %s135 = sadd.s32 %s134, 1
      %p138 = scmp.eq.s32.totalorder %s16, 1
      %p139 = scmp.ne.s32.totalorder %s134, %s136
      %p140 = scmp.eq.s32.totalorder %s16, 0
      %p141 = por %p139, %p140
      %p142 = scmp.ne.s32.totalorder %s134, %s136
      %p143 = scmp.eq.s32.totalorder %s21, 1
      %p144 = por %p142, %p143
      %p145 = scmp.ne.s32.totalorder %s136, %s137
      %p146 = scmp.eq.s32.totalorder %s21, 0
      %p147 = por %p145, %p146
      %p148 = scmp.ne.s32.totalorder %s136, %s137
      %p149 = scmp.eq.s32.totalorder %s22, 1
      %p150 = por %p148, %p149
      %p152 = scmp.ne.s32.totalorder %s137, %s151
      %p153 = scmp.eq.s32.totalorder %s22, 0
      %p154 = por %p152, %p153
      %s156 = sadd.s32 %s155, 1
      %p159 = scmp.eq.s32.totalorder %s16, 1
      %p160 = scmp.ne.s32.totalorder %s155, %s157
      %p161 = scmp.eq.s32.totalorder %s16, 0
      %p162 = por %p160, %p161
      %p163 = scmp.ne.s32.totalorder %s155, %s157
      %p164 = scmp.eq.s32.totalorder %s21, 1
      %p165 = por %p163, %p164
      %p166 = scmp.ne.s32.totalorder %s157, %s158
      %p167 = scmp.eq.s32.totalorder %s21, 0
      %p168 = por %p166, %p167
      %p169 = scmp.ne.s32.totalorder %s157, %s158
      %p170 = scmp.eq.s32.totalorder %s22, 1
      %p171 = por %p169, %p170
      %p173 = scmp.ne.s32.totalorder %s158, %s172
      %p174 = scmp.eq.s32.totalorder %s22, 0
      %p175 = por %p173, %p174
      %s176 = ssub.s32 %s16, %s23
      %p177 = scmp.eq.s32.totalorder %s176, 0
      %s179 = sadd.s32 %s178, 1
      %s180 = scalar_select %p177, %s178, %s179
      %p183 = pneg %p177
      %p184 = scmp.eq.s32.totalorder %s16, 1
      %p185 = por %p183, %p184
      %p186 = scmp.ne.s32.totalorder %s178, %s181
      %p187 = scmp.eq.s32.totalorder %s16, 0
      %p188 = por %p186, %p187
      %p189 = scmp.ne.s32.totalorder %s178, %s181
      %p190 = scmp.eq.s32.totalorder %s21, 1
      %p191 = por %p189, %p190
      %p192 = scmp.ne.s32.totalorder %s181, %s182
      %p193 = scmp.eq.s32.totalorder %s21, 0
      %p194 = por %p192, %p193
      %p195 = scmp.ne.s32.totalorder %s181, %s182
      %p196 = scmp.eq.s32.totalorder %s22, 1
      %p197 = por %p195, %p196
      %p199 = scmp.ne.s32.totalorder %s182, %s198
      %p200 = scmp.eq.s32.totalorder %s22, 0
      %p201 = por %p199, %p200
      %p202 = scmp.le.s32.totalorder 1, %s16
      %p203 = scmp.lt.s32.totalorder %s16, 3
      %p204 = pnand %p202, %p203
      %p205 = pneg %p204
      // Predicated region
      $region9: #{tpu_custom_call.1} parent=5 // pred_check
        _
      $region10: #{tpu_custom_call.1} parent=5 // pred_check_branch
        %207 = sbr.rel (%p204) target = $region12
      $region11: #{tpu_custom_call.1} parent=5 // pred_region
        %s208 = ssub.s32 %s16, 1
        // Predicated region
        $region13: #{tpu_custom_call.1} parent=11 // pred_check
          %p209 = pneg %p63
        $region14: #{tpu_custom_call.1} parent=11 // pred_check_branch
          %211 = sbr.rel (%p209) target = $region16
        $region15: #{tpu_custom_call.1} parent=11 // pred_region
          _
        $region16: #{tpu_custom_call.1} parent=11 // pred_fallthru
          _
        // Predicated region
        $region17: #{tpu_custom_call.1} parent=11 // pred_check
          %p212 = pneg %p84
        $region18: #{tpu_custom_call.1} parent=11 // pred_check_branch
          %214 = sbr.rel (%p212) target = $region20
        $region19: #{tpu_custom_call.1} parent=11 // pred_region
          _
        $region20: #{tpu_custom_call.1} parent=11 // pred_fallthru
          _
        // Predicated region
        $region21: #{tpu_custom_call.1} parent=11 // pred_check
          %p215 = pneg %p105
        $region22: #{tpu_custom_call.1} parent=11 // pred_check_branch
          %217 = sbr.rel (%p215) target = $region24
        $region23: #{tpu_custom_call.1} parent=11 // pred_region
          _
        $region24: #{tpu_custom_call.1} parent=11 // pred_fallthru
          _
        // Predicated region
        $region25: #{tpu_custom_call.1} parent=11 // pred_check
          %p218 = pneg %p126
        $region26: #{tpu_custom_call.1} parent=11 // pred_check_branch
          %220 = sbr.rel (%p218) target = $region28
        $region27: #{tpu_custom_call.1} parent=11 // pred_region
          _
        $region28: #{tpu_custom_call.1} parent=11 // pred_fallthru
          _
        // Predicated region
        $region29: #{tpu_custom_call.1} parent=11 // pred_check
          %p221 = pneg %p147
        $region30: #{tpu_custom_call.1} parent=11 // pred_check_branch
          %223 = sbr.rel (%p221) target = $region32
        $region31: #{tpu_custom_call.1} parent=11 // pred_region
          _
        $region32: #{tpu_custom_call.1} parent=11 // pred_fallthru
          _
        // Predicated region
        $region33: #{tpu_custom_call.1} parent=11 // pred_check
          %p224 = pneg %p168
        $region34: #{tpu_custom_call.1} parent=11 // pred_check_branch
          %226 = sbr.rel (%p224) target = $region36
        $region35: #{tpu_custom_call.1} parent=11 // pred_region
          _
        $region36: #{tpu_custom_call.1} parent=11 // pred_fallthru
          _
      $region12: #{tpu_custom_call.1} parent=5 // pred_fallthru
        _
      %p227 = scmp.lt.s32.totalorder %s16, 2
      // Predicated region
      $region37: #{tpu_custom_call.1} parent=5 // pred_check
        %p228 = pneg %p227
      $region38: #{tpu_custom_call.1} parent=5 // pred_check_branch
        %230 = sbr.rel (%p228) target = $region40
      $region39: #{tpu_custom_call.1} parent=5 // pred_region
        // Predicated region
        $region41: #{tpu_custom_call.1} parent=39 // pred_check
          %p231 = pneg %p36
        $region42: #{tpu_custom_call.1} parent=39 // pred_check_branch
          %233 = sbr.rel (%p231) target = $region44
        $region43: #{tpu_custom_call.1} parent=39 // pred_region
          %s234 = sand.u32 %s26, 1
          %s235 = sand.u32 %s26, 1
          %s236 = smul.addr %s235, 32
          %s237 = scalar_lea.vmem [#allocation2], %s236
          %s238 = smul.u32 2, %s16
          %s239 = smul.addr %s238, 8
          %s240 = scalar_lea.vmem %s0, %s239
          // Predicated region
          $region45: #{tpu_custom_call.1} parent=43 // pred_check
            _
          $region46: #{tpu_custom_call.1} parent=43 // pred_check_branch
            %242 = sbr.rel (0) target = $region48
          $region47: #{tpu_custom_call.1} parent=43 // pred_region
            // Predicated region
            $region49: #{tpu_custom_call.1} parent=47 // pred_check
              _
            $region50: #{tpu_custom_call.1} parent=47 // pred_check_branch
              %244 = sbr.rel (0) target = $region52
            $region51: #{tpu_custom_call.1} parent=47 // pred_region
              loop: start=0, step=1, limit=1
              $region53: #{tpu_custom_call.1} parent=51 // loop_pre_header
                _
              $region54: #{tpu_custom_call.1} parent=51 // loop_header
                %s246 = sphi 0, %s250
                %p247 = scmp.ge.s32.totalorder %s246, 1
                %s251 = sphi %s240, %s240
                %s252 = sphi %s237, %s237
              $region55: #{tpu_custom_call.1} parent=51 // loop_header_branch
                %249 = sbr.rel (%p247) target = $region59
              $region56: #{tpu_custom_call.1} parent=51 // loop_body
                %v253 = vld [vmem:[%s251] sm:$0xff]
                %254 = vst [vmem:[%s252] sm:$0xff] %v253
                %v255 = vld [vmem:[%s251 + $0x8] sm:$0xff]
                %256 = vst [vmem:[%s252 + $0x8] sm:$0xff] %v255
                %v257 = vld [vmem:[%s251 + $0x20] sm:$0xff]
                %258 = vst [vmem:[%s252 + $0x10] sm:$0xff] %v257
                %v259 = vld [vmem:[%s251 + $0x28] sm:$0xff]
                %260 = vst [vmem:[%s252 + $0x18] sm:$0xff] %v259
              $region57: #{tpu_custom_call.1} parent=51 // loop_footer
                %s250 = sadd.s32 1, %s246
              $region58: #{tpu_custom_call.1} parent=51 // loop_footer_branch
                %245 = sbr.rel target = $region54
              $region59: #{tpu_custom_call.1} parent=51 // loop_exit
                _
            $region52: #{tpu_custom_call.1} parent=47 // pred_fallthru
              _
            // Predicated region
            $region60: #{tpu_custom_call.1} parent=47 // pred_check
              _
            $region61: #{tpu_custom_call.1} parent=47 // pred_check_branch
              %262 = sbr.rel target = $region63
            $region62: #{tpu_custom_call.1} parent=47 // pred_region
              _
            $region63: #{tpu_custom_call.1} parent=47 // pred_fallthru
              _
          $region48: #{tpu_custom_call.1} parent=43 // pred_fallthru
            _
          %263 = vnop
        $region44: #{tpu_custom_call.1} parent=39 // pred_fallthru
          _
      $region40: #{tpu_custom_call.1} parent=5 // pred_fallthru
        _
      %p264 = scmp.le.s32.totalorder 1, %s16
      %p265 = scmp.lt.s32.totalorder %s16, 3
      %p266 = pnand %p264, %p265
      %p267 = pneg %p266
      // Predicated region
      $region64: #{tpu_custom_call.1} parent=5 // pred_check
        _
      $region65: #{tpu_custom_call.1} parent=5 // pred_check_branch
        %269 = sbr.rel (%p266) target = $region67
      $region66: #{tpu_custom_call.1} parent=5 // pred_region
        %s270 = ssub.s32 %s16, 1
        %s271 = sand.u32 %s29, 1
        %s272 = sand.u32 %s29, 1
        %s273 = smul.addr %s272, 32
        %s274 = scalar_lea.vmem [#allocation2], %s273
        // Predicated region
        $region68: #{tpu_custom_call.1} parent=66 // pred_check
          %p275 = pneg %p42
        $region69: #{tpu_custom_call.1} parent=66 // pred_check_branch
          %277 = sbr.rel (%p275) target = $region71
        $region70: #{tpu_custom_call.1} parent=66 // pred_region
          _
        $region71: #{tpu_custom_call.1} parent=66 // pred_fallthru
          _
        %s278 = sand.u32 %s29, 1
        %s279 = sand.u32 %s29, 1
        %s280 = smul.addr %s279, 32
        %s281 = scalar_lea.vmem [#allocation2], %s280
        %p282 = pneg %p42
        %p283 = pneg %p39
        %p284 = pneg %p63
        %p285 = pneg %p60
        %p286 = pneg %p84
        %p287 = pneg %p81
        %p288 = pneg %p105
        %p289 = pneg %p102
        %p290 = pneg %p126
        %p291 = pneg %p123
        %p292 = pneg %p147
        %p293 = pneg %p144
        %p294 = pneg %p168
        %p295 = pneg %p165
        %p296 = pneg %p194
        %p297 = pneg %p191
        %s298 = sand.u32 %s181, 1
        %s299 = scalar_lea.sflag [#allocation4], %s298
        %s300 = sand.u32 %s181, 1
        %s301 = smul.addr %s300, 16
        %s302 = scalar_lea.vmem [#allocation3], %s301
        %s303 = smul.u32 2, %s21
        %s304 = smul.u32 2, %s21
        %v305 = vld [vmem:[%s274] sm:$0xff]
        %v306 = vld [vmem:[%s274 + $0x8] sm:$0xff]
        %v307 = vld [vmem:[%s274 + $0x10] sm:$0xff]
        %v308 = vld [vmem:[%s274 + $0x18] sm:$0xff]
        %v309 = vld [vmem:[%s1] sm:$0xff]
        %v310 = vld [vmem:[%s1 + $0x8] sm:$0xff]
        %v311 = vld [vmem:[%s1 + $0x10] sm:$0xff]
        %v312 = vld [vmem:[%s1 + $0x18] sm:$0xff]
        %v313 = vld [vmem:[%s2] sm:$0xff]
        %v314 = vld [vmem:[%s2 + $0x8] sm:$0xff]
        %v315 = vld [vmem:[%s2 + $0x10] sm:$0xff]
        %v316 = vld [vmem:[%s2 + $0x18] sm:$0xff]
        %318 = vset.pattern.permute.xlu0 0
        %319 = vperm.xlu0 %318, %v313
        %v320 = vpop.permute.xlu0 %319
        %323 = vset.pattern.permute.xlu0 0
        %324 = vperm.xlu0 %323, %v314
        %v325 = vpop.permute.xlu0 %324
        %328 = vset.pattern.permute.xlu0 0
        %329 = vperm.xlu0 %328, %v315
        %v330 = vpop.permute.xlu0 %329
        %333 = vset.pattern.permute.xlu0 0
        %334 = vperm.xlu0 %333, %v316
        %v335 = vpop.permute.xlu0 %334
        %vm337 = vcmask 130048
        %v339 = vsel %vm337, %v309, 0
        %v342 = vsel %vm337, %v310, 0
        %v345 = vsel %vm337, %v311, 0
        %v348 = vsel %vm337, %v312, 0
        %350 = vmatprep.subr.mxu0 %v306
        %351 = vmatpush1.msra.mxu0 %v305
        %352 = vmatprep.subr.mxu0 %v308
        %353 = vmatpush1.msra.mxu0 %v307
        %354 = vmatprep.subr.mxu0 0.0
        %355 = vmatpush1.msra.mxu0 0.0
        %356 = vmatprep.subr.mxu0 0.0
        %357 = vmatpush1.msra.mxu0 0.0
        %358 = vmatprep.subr.mxu0 0.0
        %359 = vmatpush1.msra.mxu0 0.0
        %360 = vmatprep.subr.mxu0 0.0
        %361 = vmatpush1.msra.mxu0 0.0
        %362 = vmatprep.subr.mxu0 0.0
        %363 = vmatpush1.msra.mxu0 0.0
        %364 = vmatprep.subr.mxu0 0.0
        %365 = vmatpush1.msra.mxu0 0.0
        %366 = vmatprep.subr.mxu0 0.0
        %367 = vmatpush1.msra.mxu0 0.0
        %368 = vmatprep.subr.mxu0 0.0
        %369 = vmatpush1.msra.mxu0 0.0
        %370 = vmatprep.subr.mxu0 0.0
        %371 = vmatpush1.msra.mxu0 0.0
        %372 = vmatprep.subr.mxu0 0.0
        %373 = vmatpush1.msra.mxu0 0.0
        %374 = vmatprep.subr.mxu0 0.0
        %375 = vmatpush1.msra.mxu0 0.0
        %376 = vmatprep.subr.mxu0 0.0
        %377 = vmatpush1.msra.mxu0 0.0
        %378 = vmatprep.subr.mxu0 0.0
        %379 = vmatpush1.msra.mxu0 0.0
        %380 = vmatprep.subr.mxu0 0.0
        %381 = vmatpush1.msra.mxu0 0.0
        %382 = vmatprep.subr.mxu0 0.0
        %383 = vmatpush1.msra.mxu0 0.0
        %384 = vmatprep.subr.mxu0 0.0
        %385 = vmatpush1.msra.mxu0 0.0
        %386 = vmatprep.subr.mxu0 0.0
        %387 = vmatpush1.msra.mxu0 0.0
        %388 = vmatprep.subr.mxu0 0.0
        %389 = vmatpush1.msra.mxu0 0.0
        %390 = vmatprep.subr.mxu0 0.0
        %391 = vmatpush1.msra.mxu0 0.0
        %392 = vmatprep.subr.mxu0 0.0
        %393 = vmatpush1.msra.mxu0 0.0
        %394 = vmatprep.subr.mxu0 0.0
        %395 = vmatpush1.msra.mxu0 0.0
        %396 = vmatprep.subr.mxu0 0.0
        %397 = vmatpush1.msra.mxu0 0.0
        %398 = vmatprep.subr.mxu0 0.0
        %399 = vmatpush1.msra.mxu0 0.0
        %400 = vmatprep.subr.mxu0 0.0
        %401 = vmatpush1.msra.mxu0 0.0
        %402 = vmatprep.subr.mxu0 0.0
        %403 = vmatpush1.msra.mxu0 0.0
        %404 = vmatprep.subr.mxu0 0.0
        %405 = vmatpush1.msra.mxu0 0.0
        %406 = vmatprep.subr.mxu0 0.0
        %407 = vmatpush1.msra.mxu0 0.0
        %408 = vmatprep.subr.mxu0 0.0
        %409 = vmatpush1.msra.mxu0 0.0
        %410 = vmatprep.subr.mxu0 0.0
        %411 = vmatpush1.msra.mxu0 0.0
        %412 = vmatprep.subr.mxu0 0.0
        %413 = vmatpush1.msra.mxu0 0.0
        %414 = vmatprep.mubr.f32.mxu0 0.0
        %415 = vmatmul.mubr.f32.gmra.mrb[0].mxu0 %v339
        %v416 = vpop.f32.mrb[0].mxu0
        %v417 = vadd.f32 %v320, %v416
        %v418 = vpop.f32.mrb[0].mxu0
        %v419 = vadd.f32 %v320, %v418
        %420 = vmatprep.mubr.f32.mxu0 0.0
        %421 = vmatmul.mubr.f32.gmra.mrb[0].mxu0 %v342
        %v422 = vpop.f32.mrb[0].mxu0
        %v423 = vadd.f32 %v325, %v422
        %v424 = vpop.f32.mrb[0].mxu0
        %v425 = vadd.f32 %v325, %v424
        %426 = vmatprep.mubr.f32.mxu0 0.0
        %427 = vmatmul.mubr.f32.gmra.mrb[0].mxu0 %v345
        %v428 = vpop.f32.mrb[0].mxu0
        %v429 = vadd.f32 %v330, %v428
        %v430 = vpop.f32.mrb[0].mxu0
        %v431 = vadd.f32 %v330, %v430
        %432 = vmatprep.mubr.f32.mxu0 0.0
        %433 = vmatmul.mubr.f32.gmra.mrb[0].mxu0 %v348
        %v434 = vpop.f32.mrb[0].mxu0
        %v435 = vadd.f32 %v335, %v434
        %v436 = vpop.f32.mrb[0].mxu0
        %v437 = vadd.f32 %v335, %v436
        %438 = vdwg.mxu0
        %v439 = vmax.f32 %v417, 0.0
        %v440 = vmax.f32 %v419, 0.0
        %v441 = vmax.f32 %v423, 0.0
        %v442 = vmax.f32 %v425, 0.0
        %v443 = vmax.f32 %v429, 0.0
        %v444 = vmax.f32 %v431, 0.0
        %v445 = vmax.f32 %v435, 0.0
        %v446 = vmax.f32 %v437, 0.0
        %v447 = vld [vmem:[%s3] sm:$0xff]
        %v448 = vld [vmem:[%s3 + $0x8] sm:$0xff]
        %v449 = vld [vmem:[%s3 + $0x10] sm:$0xff]
        %v450 = vld [vmem:[%s3 + $0x18] sm:$0xff]
        %v451 = vld [vmem:[%s4] sm:$0xff]
        %v452 = vld [vmem:[%s4 + $0x8] sm:$0xff]
        %v453 = vld [vmem:[%s4 + $0x10] sm:$0xff]
        %v454 = vld [vmem:[%s4 + $0x18] sm:$0xff]
        %456 = vset.pattern.permute.xlu0 0
        %457 = vperm.xlu0 %456, %v451
        %v458 = vpop.permute.xlu0 %457
        %461 = vset.pattern.permute.xlu0 0
        %462 = vperm.xlu0 %461, %v452
        %v463 = vpop.permute.xlu0 %462
        %466 = vset.pattern.permute.xlu0 0
        %467 = vperm.xlu0 %466, %v453
        %v468 = vpop.permute.xlu0 %467
        %471 = vset.pattern.permute.xlu0 0
        %472 = vperm.xlu0 %471, %v454
        %v473 = vpop.permute.xlu0 %472
        %vm475 = vcmask 261120
        %v477 = vsel %vm475, %v447, 0
        %v480 = vsel %vm475, %v448, 0
        %v483 = vsel %vm475, %v449, 0
        %v486 = vsel %vm475, %v450, 0
        %488 = vmatprep.subr.mxu0 %v440
        %489 = vmatpush1.msra.mxu0 %v439
        %490 = vmatprep.subr.mxu0 %v442
        %491 = vmatpush1.msra.mxu0 %v441
        %492 = vmatprep.subr.mxu0 %v444
        %493 = vmatpush1.msra.mxu0 %v443
        %494 = vmatprep.subr.mxu0 %v446
        %495 = vmatpush1.msra.mxu0 %v445
        %496 = vmatprep.subr.mxu0 0.0
        %497 = vmatpush1.msra.mxu0 0.0
        %498 = vmatprep.subr.mxu0 0.0
        %499 = vmatpush1.msra.mxu0 0.0
        %500 = vmatprep.subr.mxu0 0.0
        %501 = vmatpush1.msra.mxu0 0.0
        %502 = vmatprep.subr.mxu0 0.0
        %503 = vmatpush1.msra.mxu0 0.0
        %504 = vmatprep.subr.mxu0 0.0
        %505 = vmatpush1.msra.mxu0 0.0
        %506 = vmatprep.subr.mxu0 0.0
        %507 = vmatpush1.msra.mxu0 0.0
        %508 = vmatprep.subr.mxu0 0.0
        %509 = vmatpush1.msra.mxu0 0.0
        %510 = vmatprep.subr.mxu0 0.0
        %511 = vmatpush1.msra.mxu0 0.0
        %512 = vmatprep.subr.mxu0 0.0
        %513 = vmatpush1.msra.mxu0 0.0
        %514 = vmatprep.subr.mxu0 0.0
        %515 = vmatpush1.msra.mxu0 0.0
        %516 = vmatprep.subr.mxu0 0.0
        %517 = vmatpush1.msra.mxu0 0.0
        %518 = vmatprep.subr.mxu0 0.0
        %519 = vmatpush1.msra.mxu0 0.0
        %520 = vmatprep.subr.mxu0 0.0
        %521 = vmatpush1.msra.mxu0 0.0
        %522 = vmatprep.subr.mxu0 0.0
        %523 = vmatpush1.msra.mxu0 0.0
        %524 = vmatprep.subr.mxu0 0.0
        %525 = vmatpush1.msra.mxu0 0.0
        %526 = vmatprep.subr.mxu0 0.0
        %527 = vmatpush1.msra.mxu0 0.0
        %528 = vmatprep.subr.mxu0 0.0
        %529 = vmatpush1.msra.mxu0 0.0
        %530 = vmatprep.subr.mxu0 0.0
        %531 = vmatpush1.msra.mxu0 0.0
        %532 = vmatprep.subr.mxu0 0.0
        %533 = vmatpush1.msra.mxu0 0.0
        %534 = vmatprep.subr.mxu0 0.0
        %535 = vmatpush1.msra.mxu0 0.0
        %536 = vmatprep.subr.mxu0 0.0
        %537 = vmatpush1.msra.mxu0 0.0
        %538 = vmatprep.subr.mxu0 0.0
        %539 = vmatpush1.msra.mxu0 0.0
        %540 = vmatprep.subr.mxu0 0.0
        %541 = vmatpush1.msra.mxu0 0.0
        %542 = vmatprep.subr.mxu0 0.0
        %543 = vmatpush1.msra.mxu0 0.0
        %544 = vmatprep.subr.mxu0 0.0
        %545 = vmatpush1.msra.mxu0 0.0
        %546 = vmatprep.subr.mxu0 0.0
        %547 = vmatpush1.msra.mxu0 0.0
        %548 = vmatprep.subr.mxu0 0.0
        %549 = vmatpush1.msra.mxu0 0.0
        %550 = vmatprep.subr.mxu0 0.0
        %551 = vmatpush1.msra.mxu0 0.0
        %552 = vmatprep.mubr.f32.mxu0 0.0
        %553 = vmatmul.mubr.f32.gmra.mrb[0].mxu0 %v477
        %v554 = vpop.f32.mrb[0].mxu0
        %v555 = vadd.f32 %v458, %v554
        %v556 = vpop.f32.mrb[0].mxu0
        %v557 = vadd.f32 %v458, %v556
        %558 = vmatprep.mubr.f32.mxu0 0.0
        %559 = vmatmul.mubr.f32.gmra.mrb[0].mxu0 %v480
        %v560 = vpop.f32.mrb[0].mxu0
        %v561 = vadd.f32 %v463, %v560
        %v562 = vpop.f32.mrb[0].mxu0
        %v563 = vadd.f32 %v463, %v562
        %564 = vmatprep.mubr.f32.mxu0 0.0
        %565 = vmatmul.mubr.f32.gmra.mrb[0].mxu0 %v483
        %v566 = vpop.f32.mrb[0].mxu0
        %v567 = vadd.f32 %v468, %v566
        %v568 = vpop.f32.mrb[0].mxu0
        %v569 = vadd.f32 %v468, %v568
        %570 = vmatprep.mubr.f32.mxu0 0.0
        %571 = vmatmul.mubr.f32.gmra.mrb[0].mxu0 %v486
        %v572 = vpop.f32.mrb[0].mxu0
        %v573 = vadd.f32 %v473, %v572
        %v574 = vpop.f32.mrb[0].mxu0
        %v575 = vadd.f32 %v473, %v574
        %576 = vdwg.mxu0
        %v577 = vmax.f32 %v555, 0.0
        %v578 = vmax.f32 %v557, 0.0
        %v579 = vmax.f32 %v561, 0.0
        %v580 = vmax.f32 %v563, 0.0
        %v581 = vmax.f32 %v567, 0.0
        %v582 = vmax.f32 %v569, 0.0
        %v583 = vmax.f32 %v573, 0.0
        %v584 = vmax.f32 %v575, 0.0
        %v585 = vld [vmem:[%s5] sm:$0xff]
        %v586 = vld [vmem:[%s6] sm:$0xff]
        %588 = vset.pattern.permute.xlu0 0
        %589 = vperm.xlu0 %588, %v586
        %v590 = vpop.permute.xlu0 %589
        %v593 = vsel %vm475, %v585, 0
        %595 = vmatprep.subr.mxu0 %v578
        %596 = vmatpush1.msra.mxu0 %v577
        %597 = vmatprep.subr.mxu0 %v580
        %598 = vmatpush1.msra.mxu0 %v579
        %599 = vmatprep.subr.mxu0 %v582
        %600 = vmatpush1.msra.mxu0 %v581
        %601 = vmatprep.subr.mxu0 %v584
        %602 = vmatpush1.msra.mxu0 %v583
        %603 = vmatprep.subr.mxu0 0.0
        %604 = vmatpush1.msra.mxu0 0.0
        %605 = vmatprep.subr.mxu0 0.0
        %606 = vmatpush1.msra.mxu0 0.0
        %607 = vmatprep.subr.mxu0 0.0
        %608 = vmatpush1.msra.mxu0 0.0
        %609 = vmatprep.subr.mxu0 0.0
        %610 = vmatpush1.msra.mxu0 0.0
        %611 = vmatprep.subr.mxu0 0.0
        %612 = vmatpush1.msra.mxu0 0.0
        %613 = vmatprep.subr.mxu0 0.0
        %614 = vmatpush1.msra.mxu0 0.0
        %615 = vmatprep.subr.mxu0 0.0
        %616 = vmatpush1.msra.mxu0 0.0
        %617 = vmatprep.subr.mxu0 0.0
        %618 = vmatpush1.msra.mxu0 0.0
        %619 = vmatprep.subr.mxu0 0.0
        %620 = vmatpush1.msra.mxu0 0.0
        %621 = vmatprep.subr.mxu0 0.0
        %622 = vmatpush1.msra.mxu0 0.0
        %623 = vmatprep.subr.mxu0 0.0
        %624 = vmatpush1.msra.mxu0 0.0
        %625 = vmatprep.subr.mxu0 0.0
        %626 = vmatpush1.msra.mxu0 0.0
        %627 = vmatprep.subr.mxu0 0.0
        %628 = vmatpush1.msra.mxu0 0.0
        %629 = vmatprep.subr.mxu0 0.0
        %630 = vmatpush1.msra.mxu0 0.0
        %631 = vmatprep.subr.mxu0 0.0
        %632 = vmatpush1.msra.mxu0 0.0
        %633 = vmatprep.subr.mxu0 0.0
        %634 = vmatpush1.msra.mxu0 0.0
        %635 = vmatprep.subr.mxu0 0.0
        %636 = vmatpush1.msra.mxu0 0.0
        %637 = vmatprep.subr.mxu0 0.0
        %638 = vmatpush1.msra.mxu0 0.0
        %639 = vmatprep.subr.mxu0 0.0
        %640 = vmatpush1.msra.mxu0 0.0
        %641 = vmatprep.subr.mxu0 0.0
        %642 = vmatpush1.msra.mxu0 0.0
        %643 = vmatprep.subr.mxu0 0.0
        %644 = vmatpush1.msra.mxu0 0.0
        %645 = vmatprep.subr.mxu0 0.0
        %646 = vmatpush1.msra.mxu0 0.0
        %647 = vmatprep.subr.mxu0 0.0
        %648 = vmatpush1.msra.mxu0 0.0
        %649 = vmatprep.subr.mxu0 0.0
        %650 = vmatpush1.msra.mxu0 0.0
        %651 = vmatprep.subr.mxu0 0.0
        %652 = vmatpush1.msra.mxu0 0.0
        %653 = vmatprep.subr.mxu0 0.0
        %654 = vmatpush1.msra.mxu0 0.0
        %655 = vmatprep.subr.mxu0 0.0
        %656 = vmatpush1.msra.mxu0 0.0
        %657 = vmatprep.subr.mxu0 0.0
        %658 = vmatpush1.msra.mxu0 0.0
        %659 = vmatprep.mubr.f32.mxu0 0.0
        %660 = vmatmul.mubr.f32.gmra.mrb[0].mxu0 %v593
        %v661 = vpop.f32.mrb[0].mxu0
        %v662 = vadd.f32 %v590, %v661
        %v663 = vpop.f32.mrb[0].mxu0
        %v664 = vadd.f32 %v590, %v663
        %665 = vdwg.mxu0
        %666 = vst [vmem:[%s302] sm:$0xff] %v662
        %667 = vst [vmem:[%s302 + $0x8] sm:$0xff] %v664
        %s668 = sand.u32 %s181, 1
        %s669 = scalar_lea.sflag [#allocation4], %s668
        %s670 = sand.u32 %s181, 1
        %s671 = smul.addr %s670, 16
        %s672 = scalar_lea.vmem [#allocation3], %s671
        // Predicated region
        $region72: #{tpu_custom_call.1} parent=66 // pred_check
          %p673 = pneg %p191
        $region73: #{tpu_custom_call.1} parent=66 // pred_check_branch
          %675 = sbr.rel (%p673) target = $region75
        $region74: #{tpu_custom_call.1} parent=66 // pred_region
          %s676 = smul.u32 2, %s21
          %s678 = ssub.s32 256, 256
          %679 = vsyncadd %s669, %s678
          %s680 = smul.addr %s676, 128
          %s681 = scalar_lea.hbm %s7, %s680
          %s683 = sshll.u32 %s672, 4
          %s684 = int_to_ptr.vmem [resolvable:$true] %s683
          %686 = dma.vmem_to_hbm [thread:$0]  %s684, 256, %s681, %s669
        $region75: #{tpu_custom_call.1} parent=66 // pred_fallthru
          _
      $region67: #{tpu_custom_call.1} parent=5 // pred_fallthru
        _
      %p687 = scmp.le.s32.totalorder 2, %s16
      // Predicated region
      $region76: #{tpu_custom_call.1} parent=5 // pred_check
        %p688 = pneg %p687
      $region77: #{tpu_custom_call.1} parent=5 // pred_check_branch
        %690 = sbr.rel (%p688) target = $region79
      $region78: #{tpu_custom_call.1} parent=5 // pred_region
        %s691 = ssub.s32 %s16, 2
        // Predicated region
        $region80: #{tpu_custom_call.1} parent=78 // pred_check
          %p692 = pneg %p197
        $region81: #{tpu_custom_call.1} parent=78 // pred_check_branch
          %694 = sbr.rel (%p692) target = $region83
        $region82: #{tpu_custom_call.1} parent=78 // pred_region
          %s695 = sand.u32 %s182, 1
          %s696 = scalar_lea.sflag [#allocation4], %s695
          %s697 = sand.u32 %s182, 1
          %s698 = smul.addr %s697, 16
          %s699 = scalar_lea.vmem [#allocation3], %s698
          %700 = dma.done %s696, 256
        $region83: #{tpu_custom_call.1} parent=78 // pred_fallthru
          _
      $region79: #{tpu_custom_call.1} parent=5 // pred_fallthru
        _
    $region6: #{tpu_custom_call.1} parent=1 // loop_footer
      %s20 = sadd.s32 1, %s16
    $region7: #{tpu_custom_call.1} parent=1 // loop_footer_branch
      %15 = sbr.rel target = $region3
    $region8: #{tpu_custom_call.1} parent=1 // loop_exit
      _
    %701 = vsyncpa [#allocation4], 1
    %s702 = scalar_lea.sflag [#allocation4], 1
    %703 = vsyncpa %s702, 1

</llo_original>
